<compile_context>
chip_gen: v6e
topology: v6e:2x2x1
jax: 0.10.0
libtpu: 0.0.40
codegen_flags: <defaults>
</compile_context>

<pallas_src>
import functools

import jax
import jax.numpy as jnp
from jax.experimental import pallas as pl
from jax.experimental.pallas import tpu as pltpu


def _layernorm_kernel(x_ref, scale_ref, bias_ref, o_ref, *,
                      epsilon, d_model, inv_d, inv_dm1, use_mxu_reduce):
    # x_ref: (row_tile, d_pad); scale_ref / bias_ref: (1, d_pad)
    x = x_ref[...].astype(jnp.float32)
    d_pad = x.shape[-1]

    if use_mxu_reduce:
        # 0/1 validity column: lane-masking of the padded tail is folded into
        # the MXU reduction operand (no per-element VALU mask needed).
        if d_pad == d_model:
            ones_col = jnp.ones((d_pad, 1), dtype=jnp.float32)
        else:
            ones_col = (
                jax.lax.broadcasted_iota(jnp.int32, (d_pad, 1), 0) < d_model
            ).astype(jnp.float32)

        def lane_sum(v):
            # Lane-axis sum on the MXU (vector-extended slot) instead of XLU.
            return jnp.dot(v, ones_col, preferred_element_type=jnp.float32,
                           precision=jax.lax.Precision.HIGHEST)
    else:
        if d_pad == d_model:
            lane_mask = None
        else:
            lane_mask = (
                jax.lax.broadcasted_iota(jnp.int32, (1, d_pad), 1) < d_model
            )

        def lane_sum(v):
            if lane_mask is not None:
                v = jnp.where(lane_mask, v, 0.0)
            return jnp.sum(v, axis=-1, keepdims=True)

    s1 = lane_sum(x)                                   # (row_tile, 1)
    mean = s1 * jnp.float32(inv_d)
    diff = x - mean                                    # padded lanes excluded below
    s2 = lane_sum(diff * diff)                         # (row_tile, 1), >= 0
    # torch.var default: unbiased estimator (divide by N-1).
    var = s2 * jnp.float32(inv_dm1)

    normalized = diff * jax.lax.rsqrt(var + jnp.float32(epsilon))
    scale = scale_ref[...].astype(jnp.float32)
    bias = bias_ref[...].astype(jnp.float32)
    o_ref[...] = (scale * normalized + bias).astype(o_ref.dtype)


def _round_up(n, m):
    return ((n + m - 1) // m) * m


def _vmem_bytes_estimate(row_tile, d_pad, itemsize):
    block = row_tile * d_pad * itemsize
    f32_block = row_tile * d_pad * 4
    # 2x double-buffered input + 2x double-buffered output + ~4 live f32
    # intermediates of the block (x, diff, sq, normalized) + params + slack.
    return 4 * block + 4 * f32_block + 4 * d_pad * 4 + (1 << 20)


def _pick_row_tile(rows, d_pad, itemsize, target_bytes, vmem_budget):
    # Sublane packing: 8 rows/vreg at 4B, 16 at 2B, 32 at 1B dtypes.
    pack = max(8, 32 // max(int(itemsize), 1))
    if rows <= pack:
        return int(rows)
    row_tile = max(1, target_bytes // (d_pad * itemsize))
    row_tile = max(pack, (row_tile // pack) * pack)          # align down to pack
    row_tile = min(row_tile, (rows // pack) * pack)          # don't exceed rows
    row_tile = int(max(row_tile, pack))
    # Shrink until the VMEM estimate fits this generation's budget.
    while row_tile > pack and _vmem_bytes_estimate(row_tile, d_pad, itemsize) > vmem_budget:
        row_tile = max(pack, ((row_tile // 2) // pack) * pack)
    return int(row_tile)


def layer_normalization(x, scale, bias, epsilon=1e-5, row_tile=None,
                        target_block_bytes=4 << 20):
    """x: (..., d_model); scale/bias: (d_model,). Matches the PyTorch module."""
    orig_shape = x.shape
    d_model = orig_shape[-1]
    if scale.size != d_model or bias.size != d_model:
        raise ValueError(
            f"scale/bias must have {d_model} elements, got {scale.size}/{bias.size}")

    rows = 1
    for s in orig_shape[:-1]:
        rows *= s

    # Lane-dense layout: pad the feature axis to a multiple of 128 so the
    # output store is a full (unmasked) vst.  Padded lanes are masked out of
    # the statistics in-kernel and sliced off afterwards.
    d_pad = _round_up(d_model, 128)
    x2 = x.reshape(rows, d_model)
    scale2 = scale.reshape(1, d_model)
    bias2 = bias.reshape(1, d_model)
    if d_pad != d_model:
        padw = ((0, 0), (0, d_pad - d_model))
        x2 = jnp.pad(x2, padw)
        scale2 = jnp.pad(scale2, padw)
        bias2 = jnp.pad(bias2, padw)

    itemsize = jnp.dtype(x.dtype).itemsize

    # Generation-aware VMEM budget: ~75% of physical VMEM (96 MiB on v5e/v6e,
    # 48 MiB on v7x); conservative fallback if the query is unavailable.
    try:
        vmem_cap = int(pltpu.get_tpu_info().vmem_capacity_bytes)
    except Exception:
        vmem_cap = 64 << 20
    vmem_budget = (vmem_cap * 3) // 4

    if row_tile is None:
        row_tile = _pick_row_tile(rows, d_pad, itemsize, target_block_bytes,
                                  vmem_budget)
    row_tile = min(int(row_tile), rows)

    # Partial last block (rows % row_tile != 0) handled by Pallas bounds mask.
    grid = (pl.cdiv(rows, row_tile),)

    vmem_needed = _vmem_bytes_estimate(row_tile, d_pad, itemsize)
    # Explicit limit (v5e scoped default is only 16 MiB), capped at the
    # generation budget but never below what this tiling actually needs.
    vmem_limit = int(min(max(vmem_needed, 32 << 20), max(vmem_budget, vmem_needed)))

    inv_d = 1.0 / d_model
    # torch.var's default unbiased estimator; d_model == 1 gives NaN like torch.
    inv_dm1 = 1.0 / (d_model - 1) if d_model > 1 else float("nan")

    def build(use_mxu_reduce):
        kernel = functools.partial(
            _layernorm_kernel, epsilon=float(epsilon), d_model=int(d_model),
            inv_d=inv_d, inv_dm1=inv_dm1, use_mxu_reduce=use_mxu_reduce)
        return pl.pallas_call(
            kernel,
            out_shape=jax.ShapeDtypeStruct((rows, d_pad), x.dtype),
            grid_spec=pltpu.PrefetchScalarGridSpec(
                num_scalar_prefetch=0,
                grid=grid,
                in_specs=[
                    pl.BlockSpec((row_tile, d_pad), lambda i: (i, 0)),
                    # constant index_map -> scale/bias stay VMEM-resident
                    pl.BlockSpec((1, d_pad), lambda i: (0, 0)),
                    pl.BlockSpec((1, d_pad), lambda i: (0, 0)),
                ],
                out_specs=pl.BlockSpec((row_tile, d_pad), lambda i: (i, 0)),
            ),
            compiler_params=pltpu.CompilerParams(
                # Parallel row axis -> sharded across the 2 TCs on v7x megacore.
                dimension_semantics=(pltpu.PARALLEL,),
                vmem_limit_bytes=vmem_limit,
            ),
        )

    try:
        out = build(True)(x2, scale2, bias2)
    except Exception:
        # Fallback: XLU/VALU lane reductions if the MXU dot path fails to lower.
        out = build(False)(x2, scale2, bias2)

    if d_pad != d_model:
        out = out[:, :d_model]
    return out.reshape(orig_shape)


if __name__ == "__main__":
    def ref_layernorm(x, scale, bias, eps):
        mean = jnp.mean(x, axis=-1, keepdims=True)
        var = jnp.sum((x - mean) ** 2, axis=-1, keepdims=True) / (x.shape[-1] - 1)
        return scale * (x - mean) / jnp.sqrt(var + eps) + bias

    key = jax.random.PRNGKey(0)

    # Lane-dense case (d_model multiple of 128), parameters as in the module init.
    batch, seq, d_model = 2, 8, 128
    x = jax.random.normal(key, (batch, seq, d_model), dtype=jnp.float32)
    scale = jnp.ones((d_model,), dtype=jnp.float32)
    bias = jnp.zeros((d_model,), dtype=jnp.float32)
    out = layer_normalization(x, scale, bias, epsilon=1e-5)
    jax.block_until_ready(out)
    ref = ref_layernorm(x, scale, bias, 1e-5)
    assert jnp.allclose(out, ref, atol=1e-4, rtol=1e-4), "mismatch vs reference (d=128)"

    # Non-128-multiple feature dim exercises the padded / masked-reduction path.
    d2 = 100
    k2, k3, k4 = jax.random.split(jax.random.PRNGKey(0), 3)
    x_b = jax.random.normal(k2, (4, 6, d2), dtype=jnp.float32)
    scale_b = 1.0 + 0.1 * jax.random.normal(k3, (d2,), dtype=jnp.float32)
    bias_b = 0.1 * jax.random.normal(k4, (d2,), dtype=jnp.float32)
    out_b = layer_normalization(x_b, scale_b, bias_b, epsilon=1e-5)
    jax.block_until_ready(out_b)
    ref_b = ref_layernorm(x_b, scale_b, bias_b, 1e-5)
    assert jnp.allclose(out_b, ref_b, atol=1e-4, rtol=1e-4), "mismatch vs reference (d=100)"

    print("KERNEL_OK")
</pallas_src>

<mosaic_0001>
module attributes {stable_mosaic.version = 11 : i64} {
  func.func @_layernorm_kernel(%arg0: i32, %arg1: memref<16x128xf32, #tpu.memory_space<vmem>>, %arg2: memref<1x128xf32, #tpu.memory_space<vmem>>, %arg3: memref<1x128xf32, #tpu.memory_space<vmem>>, %arg4: memref<16x128xf32, #tpu.memory_space<vmem>>) attributes {dimension_semantics = [#tpu.dimension_semantics<parallel>], iteration_bounds = array<i64: 1>, scalar_prefetch = 0 : i64, scratch_operands = 0 : i64, tpu.core_type = #tpu.core_type<tc>, window_params = [{transform_indices = @transform_0, window_bounds = array<i64: 16, 128>}, {pipeline_mode = #tpu.pipeline_mode<synchronous>, transform_indices = @transform_1, window_bounds = array<i64: 1, 128>}, {pipeline_mode = #tpu.pipeline_mode<synchronous>, transform_indices = @transform_2, window_bounds = array<i64: 1, 128>}, {transform_indices = @transform_3, window_bounds = array<i64: 16, 128>}]} {
    %c0 = arith.constant 0 : index
    %c0_0 = arith.constant 0 : index
    %0 = vector.load %arg1[%c0, %c0_0] : memref<16x128xf32, #tpu.memory_space<vmem>>, vector<16x128xf32>
    %cst = arith.constant 1.000000e+00 : f32
    %1 = vector.broadcast %cst : f32 to vector<128x1xf32>
    %cst_1 = arith.constant dense<0.000000e+00> : vector<16x1xf32>
    %2 = tpu.matmul %0, %1, %cst_1 {dimension_numbers = #tpu.dot_dimension_numbers<[1], [0], [0], [1], [0, 0, 1, 1], [], []>, precision = #tpu.contract_precision<fp32>} : vector<16x128xf32>, vector<128x1xf32>, vector<16x1xf32> -> vector<16x1xf32>
    %cst_2 = arith.constant 7.812500e-03 : f32
    %3 = vector.broadcast %cst_2 : f32 to vector<16x1xf32>
    %4 = arith.mulf %2, %3 : vector<16x1xf32>
    %5 = vector.broadcast %4 : vector<16x1xf32> to vector<16x128xf32>
    %6 = arith.subf %0, %5 : vector<16x128xf32>
    %7 = arith.mulf %6, %6 : vector<16x128xf32>
    %cst_3 = arith.constant dense<0.000000e+00> : vector<16x1xf32>
    %8 = tpu.matmul %7, %1, %cst_3 {dimension_numbers = #tpu.dot_dimension_numbers<[1], [0], [0], [1], [0, 0, 1, 1], [], []>, precision = #tpu.contract_precision<fp32>} : vector<16x128xf32>, vector<128x1xf32>, vector<16x1xf32> -> vector<16x1xf32>
    %cst_4 = arith.constant 0.00787401571 : f32
    %9 = vector.broadcast %cst_4 : f32 to vector<16x1xf32>
    %10 = arith.mulf %8, %9 : vector<16x1xf32>
    %cst_5 = arith.constant 9.99999974E-6 : f32
    %11 = vector.broadcast %cst_5 : f32 to vector<16x1xf32>
    %12 = arith.addf %10, %11 : vector<16x1xf32>
    %13 = math.rsqrt %12 : vector<16x1xf32>
    %14 = vector.broadcast %13 : vector<16x1xf32> to vector<16x128xf32>
    %15 = arith.mulf %6, %14 : vector<16x128xf32>
    %c0_6 = arith.constant 0 : index
    %c0_7 = arith.constant 0 : index
    %16 = vector.load %arg2[%c0_6, %c0_7] : memref<1x128xf32, #tpu.memory_space<vmem>>, vector<1x128xf32>
    %c0_8 = arith.constant 0 : index
    %c0_9 = arith.constant 0 : index
    %17 = vector.load %arg3[%c0_8, %c0_9] : memref<1x128xf32, #tpu.memory_space<vmem>>, vector<1x128xf32>
    %18 = vector.broadcast %16 : vector<1x128xf32> to vector<16x128xf32>
    %19 = arith.mulf %18, %15 : vector<16x128xf32>
    %20 = vector.broadcast %17 : vector<1x128xf32> to vector<16x128xf32>
    %21 = arith.addf %19, %20 : vector<16x128xf32>
    %c0_10 = arith.constant 0 : index
    %c0_11 = arith.constant 0 : index
    %22 = vector.load %arg4[%c0_10, %c0_11] : memref<16x128xf32, #tpu.memory_space<vmem>>, vector<16x128xf32>
    tpu.vector_store %arg4[%c0_10, %c0_11], %21 {strides = array<i32>} : memref<16x128xf32, #tpu.memory_space<vmem>>, vector<16x128xf32>,
    return
  }
  func.func @transform_0(%arg0: i32) -> (i32, i32) {
    %c0_i32 = arith.constant 0 : i32
    %c0_i32_0 = arith.constant 0 : i32
    return %arg0, %c0_i32 : i32, i32
  }
  func.func @transform_1(%arg0: i32) -> (i32, i32) {
    %c0_i32 = arith.constant 0 : i32
    %c0_i32_0 = arith.constant 0 : i32
    %c0_i32_1 = arith.constant 0 : i32
    return %c0_i32, %c0_i32_0 : i32, i32
  }
  func.func @transform_2(%arg0: i32) -> (i32, i32) {
    %c0_i32 = arith.constant 0 : i32
    %c0_i32_0 = arith.constant 0 : i32
    %c0_i32_1 = arith.constant 0 : i32
    return %c0_i32, %c0_i32_0 : i32, i32
  }
  func.func @transform_3(%arg0: i32) -> (i32, i32) {
    %c0_i32 = arith.constant 0 : i32
    %c0_i32_0 = arith.constant 0 : i32
    return %arg0, %c0_i32 : i32, i32
  }
}

module attributes {stable_mosaic.version = 11 : i64} {
  func.func @_layernorm_kernel(%arg0: i32, %arg1: memref<16x128xf32, #tpu.memory_space<vmem>>, %arg2: memref<1x128xf32, #tpu.memory_space<vmem>>, %arg3: memref<1x128xf32, #tpu.memory_space<vmem>>, %arg4: memref<16x128xf32, #tpu.memory_space<vmem>>) attributes {dimension_semantics = [#tpu.dimension_semantics<parallel>], iteration_bounds = array<i64: 1>, scalar_prefetch = 0 : i64, scratch_operands = 0 : i64, tpu.core_type = #tpu.core_type<tc>, window_params = [{transform_indices = @transform_0, window_bounds = array<i64: 16, 128>}, {pipeline_mode = #tpu.pipeline_mode<synchronous>, transform_indices = @transform_1, window_bounds = array<i64: 1, 128>}, {pipeline_mode = #tpu.pipeline_mode<synchronous>, transform_indices = @transform_2, window_bounds = array<i64: 1, 128>}, {transform_indices = @transform_3, window_bounds = array<i64: 16, 128>}]} {
    %c0 = arith.constant 0 : index
    %c0_0 = arith.constant 0 : index
    %0 = vector.load %arg1[%c0, %c0_0] : memref<16x128xf32, #tpu.memory_space<vmem>>, vector<16x128xf32>
    %cst = arith.constant dense<0.000000e+00> : vector<16xf32>
    %1 = vector.multi_reduction <add>, %0, %cst [1] : vector<16x128xf32> to vector<16xf32>
    %2 = vector.shape_cast %1 : vector<16xf32> to vector<16x1xf32>
    %cst_1 = arith.constant 7.812500e-03 : f32
    %3 = vector.broadcast %cst_1 : f32 to vector<16x1xf32>
    %4 = arith.mulf %2, %3 : vector<16x1xf32>
    %5 = vector.broadcast %4 : vector<16x1xf32> to vector<16x128xf32>
    %6 = arith.subf %0, %5 : vector<16x128xf32>
    %7 = arith.mulf %6, %6 : vector<16x128xf32>
    %cst_2 = arith.constant dense<0.000000e+00> : vector<16xf32>
    %8 = vector.multi_reduction <add>, %7, %cst_2 [1] : vector<16x128xf32> to vector<16xf32>
    %9 = vector.shape_cast %8 : vector<16xf32> to vector<16x1xf32>
    %cst_3 = arith.constant 0.00787401571 : f32
    %10 = vector.broadcast %cst_3 : f32 to vector<16x1xf32>
    %11 = arith.mulf %9, %10 : vector<16x1xf32>
    %cst_4 = arith.constant 9.99999974E-6 : f32
    %12 = vector.broadcast %cst_4 : f32 to vector<16x1xf32>
    %13 = arith.addf %11, %12 : vector<16x1xf32>
    %14 = math.rsqrt %13 : vector<16x1xf32>
    %15 = vector.broadcast %14 : vector<16x1xf32> to vector<16x128xf32>
    %16 = arith.mulf %6, %15 : vector<16x128xf32>
    %c0_5 = arith.constant 0 : index
    %c0_6 = arith.constant 0 : index
    %17 = vector.load %arg2[%c0_5, %c0_6] : memref<1x128xf32, #tpu.memory_space<vmem>>, vector<1x128xf32>
    %c0_7 = arith.constant 0 : index
    %c0_8 = arith.constant 0 : index
    %18 = vector.load %arg3[%c0_7, %c0_8] : memref<1x128xf32, #tpu.memory_space<vmem>>, vector<1x128xf32>
    %19 = vector.broadcast %17 : vector<1x128xf32> to vector<16x128xf32>
    %20 = arith.mulf %19, %16 : vector<16x128xf32>
    %21 = vector.broadcast %18 : vector<1x128xf32> to vector<16x128xf32>
    %22 = arith.addf %20, %21 : vector<16x128xf32>
    %c0_9 = arith.constant 0 : index
    %c0_10 = arith.constant 0 : index
    %23 = vector.load %arg4[%c0_9, %c0_10] : memref<16x128xf32, #tpu.memory_space<vmem>>, vector<16x128xf32>
    tpu.vector_store %arg4[%c0_9, %c0_10], %22 {strides = array<i32>} : memref<16x128xf32, #tpu.memory_space<vmem>>, vector<16x128xf32>,
    return
  }
  func.func @transform_0(%arg0: i32) -> (i32, i32) {
    %c0_i32 = arith.constant 0 : i32
    %c0_i32_0 = arith.constant 0 : i32
    return %arg0, %c0_i32 : i32, i32
  }
  func.func @transform_1(%arg0: i32) -> (i32, i32) {
    %c0_i32 = arith.constant 0 : i32
    %c0_i32_0 = arith.constant 0 : i32
    %c0_i32_1 = arith.constant 0 : i32
    return %c0_i32, %c0_i32_0 : i32, i32
  }
  func.func @transform_2(%arg0: i32) -> (i32, i32) {
    %c0_i32 = arith.constant 0 : i32
    %c0_i32_0 = arith.constant 0 : i32
    %c0_i32_1 = arith.constant 0 : i32
    return %c0_i32, %c0_i32_0 : i32, i32
  }
  func.func @transform_3(%arg0: i32) -> (i32, i32) {
    %c0_i32 = arith.constant 0 : i32
    %c0_i32_0 = arith.constant 0 : i32
    return %arg0, %c0_i32 : i32, i32
  }
}

</mosaic_0001>

<llo_original>
// kernel: tpu_custom_call.1
$region0: #{tpu_custom_call.1}
  #allocation0 [shape = 'u32[]', space=smem, size = 0x4, offset = 0x4, fixed_abs, tag = 'smem constant byte address 0x4 - core index']
  #allocation1 [shape = 'u32[144,128]{1,0:T(1,128)}', space=vmem, size = 0x12000, scoped, tag = 'internal scratch']
  %s0 = inlined_call_operand.hbm [shape: f32[16,128], index: 0, kind: input, shape index: {}]
  %s1 = inlined_call_operand.vmem [shape: f32[1,128], index: 1, kind: input, shape index: {}]
  %s2 = inlined_call_operand.vmem [shape: f32[1,128], index: 2, kind: input, shape index: {}]
  %s3 = inlined_call_operand.hbm [shape: f32[16,128], index: 3, kind: output, shape index: {}]
  %s4 = sld [smem:[#allocation0]]
  $region26: #{tpu_custom_call.1} parent=0
    _
  %s6 = ssub.s32 1, %s4
  %s7 = scalar_select 0, %s6, %s4
  $region1: #{tpu_custom_call.1} parent=0
    #allocation2 [shape = 'u8[8192]{0}', space=vmem, size = 0x2000, scoped, tag = 'input window, operand 0, single buffered']
    #allocation3 [shape = 's32[1]{0}', space=sflag, size = 0x4, scoped, tag = 'scoped memory for tpu_custom_call.1']
    #allocation4 [shape = 's32[1]{0}', space=sflag, size = 0x4, scoped, tag = 'scoped memory for tpu_custom_call.1']
    #allocation5 [shape = 'u8[8192]{0}', space=vmem, size = 0x2000, scoped, tag = 'output window, operand 0, single buffered']
    %8 = vsyncpa [#allocation3], 0
    %9 = vsyncpa [#allocation4], 0
    // Predicated region
    $region2: #{tpu_custom_call.1} parent=1 // pred_check
      _
    $region3: #{tpu_custom_call.1} parent=1 // pred_check_branch
      %11 = sbr.rel (0) target = $region5
    $region4: #{tpu_custom_call.1} parent=1 // pred_region
      %s13 = ssub.s32 256, 256
      %14 = vsyncadd [#allocation3], %s13
      %s15 = sshll.u32 [#allocation2], 4
      %s16 = int_to_ptr.vmem [resolvable:$true] %s15
      %21 = dma.hbm_to_vmem [thread:$0]  %s0, 256, %s16, [#allocation3], 128, 128, 8
    $region5: #{tpu_custom_call.1} parent=1 // pred_fallthru
      _
    // Predicated region
    $region6: #{tpu_custom_call.1} parent=1 // pred_check
      _
    $region7: #{tpu_custom_call.1} parent=1 // pred_check_branch
      %23 = sbr.rel (0) target = $region9
    $region8: #{tpu_custom_call.1} parent=1 // pred_region
      _
    $region9: #{tpu_custom_call.1} parent=1 // pred_fallthru
      _
    // Predicated region
    $region10: #{tpu_custom_call.1} parent=1 // pred_check
      _
    $region11: #{tpu_custom_call.1} parent=1 // pred_check_branch
      %25 = sbr.rel (0) target = $region13
    $region12: #{tpu_custom_call.1} parent=1 // pred_region
      _
    $region13: #{tpu_custom_call.1} parent=1 // pred_fallthru
      _
    // Predicated region
    $region14: #{tpu_custom_call.1} parent=1 // pred_check
      _
    $region15: #{tpu_custom_call.1} parent=1 // pred_check_branch
      %27 = sbr.rel (0) target = $region17
    $region16: #{tpu_custom_call.1} parent=1 // pred_region
      %28 = dma.done [#allocation3], 256
    $region17: #{tpu_custom_call.1} parent=1 // pred_fallthru
      _
    %v29 = vld [vmem:[#allocation2] sm:$0xff]
    %v30 = vld [vmem:[#allocation2 + $0x8] sm:$0xff]
    %31 = vmatprep.subr.mxu0 0.0
    %32 = vmatpush1.msra.mxu0 1.0
    %33 = vmatprep.subr.mxu0 0.0
    %34 = vmatpush1.msra.mxu0 1.0
    %35 = vmatprep.subr.mxu0 0.0
    %36 = vmatpush1.msra.mxu0 1.0
    %37 = vmatprep.subr.mxu0 0.0
    %38 = vmatpush1.msra.mxu0 1.0
    %39 = vmatprep.subr.mxu0 0.0
    %40 = vmatpush1.msra.mxu0 1.0
    %41 = vmatprep.subr.mxu0 0.0
    %42 = vmatpush1.msra.mxu0 1.0
    %43 = vmatprep.subr.mxu0 0.0
    %44 = vmatpush1.msra.mxu0 1.0
    %45 = vmatprep.subr.mxu0 0.0
    %46 = vmatpush1.msra.mxu0 1.0
    %47 = vmatprep.subr.mxu0 0.0
    %48 = vmatpush1.msra.mxu0 1.0
    %49 = vmatprep.subr.mxu0 0.0
    %50 = vmatpush1.msra.mxu0 1.0
    %51 = vmatprep.subr.mxu0 0.0
    %52 = vmatpush1.msra.mxu0 1.0
    %53 = vmatprep.subr.mxu0 0.0
    %54 = vmatpush1.msra.mxu0 1.0
    %55 = vmatprep.subr.mxu0 0.0
    %56 = vmatpush1.msra.mxu0 1.0
    %57 = vmatprep.subr.mxu0 0.0
    %58 = vmatpush1.msra.mxu0 1.0
    %59 = vmatprep.subr.mxu0 0.0
    %60 = vmatpush1.msra.mxu0 1.0
    %61 = vmatprep.subr.mxu0 0.0
    %62 = vmatpush1.msra.mxu0 1.0
    %63 = vmatprep.subr.mxu0 0.0
    %64 = vmatpush2.msra.mxu0 0.0
    %65 = vmatprep.subr.mxu0 0.0
    %66 = vmatpush2.msra.mxu0 0.0
    %67 = vmatprep.subr.mxu0 0.0
    %68 = vmatpush2.msra.mxu0 0.0
    %69 = vmatprep.subr.mxu0 0.0
    %70 = vmatpush2.msra.mxu0 0.0
    %71 = vmatprep.subr.mxu0 0.0
    %72 = vmatpush2.msra.mxu0 0.0
    %73 = vmatprep.subr.mxu0 0.0
    %74 = vmatpush2.msra.mxu0 0.0
    %75 = vmatprep.subr.mxu0 0.0
    %76 = vmatpush2.msra.mxu0 0.0
    %77 = vmatprep.subr.mxu0 0.0
    %78 = vmatpush2.msra.mxu0 0.0
    %79 = vmatprep.subr.mxu0 0.0
    %80 = vmatpush2.msra.mxu0 0.0
    %81 = vmatprep.subr.mxu0 0.0
    %82 = vmatpush2.msra.mxu0 0.0
    %83 = vmatprep.subr.mxu0 0.0
    %84 = vmatpush2.msra.mxu0 0.0
    %85 = vmatprep.subr.mxu0 0.0
    %86 = vmatpush2.msra.mxu0 0.0
    %87 = vmatprep.subr.mxu0 0.0
    %88 = vmatpush2.msra.mxu0 0.0
    %89 = vmatprep.subr.mxu0 0.0
    %90 = vmatpush2.msra.mxu0 0.0
    %91 = vmatprep.subr.mxu0 0.0
    %92 = vmatpush2.msra.mxu0 0.0
    %93 = vmatprep.subr.mxu0 0.0
    %94 = vmatpush2.msra.mxu0 0.0
    %95 = vmatprep.mubr.f32.mxu0 0.0
    %v96 = vand.u32 %v29, 4294901760
    %v97 = vsub.f32 %v29, %v96
    %v98 = vand.u32 %v97, 4294901760
    %v99 = vsub.f32 %v97, %v98
    %v100 = vand.u32 %v99, 4294901760
    %101 = vmatmul.mubr.f32.gmra.mxu0 %v100
    %v102 = vpop.f32.mrf.mxu0
    %v103 = vadd.f32 0.0, %v102
    %v104 = vpop.f32.mrf.mxu0
    %105 = vmatprep.mubr.f32.mxu0 0.0
    %v106 = vand.u32 %v30, 4294901760
    %v107 = vsub.f32 %v30, %v106
    %v108 = vand.u32 %v107, 4294901760
    %v109 = vsub.f32 %v107, %v108
    %v110 = vand.u32 %v109, 4294901760
    %111 = vmatmul.mubr.f32.gmra.mxu0 %v110
    %v112 = vpop.f32.mrf.mxu0
    %v113 = vadd.f32 0.0, %v112
    %v114 = vpop.f32.mrf.mxu0
    %115 = vdwg.mxu0
    %116 = vmatprep.subr.mxu0 0.0
    %117 = vmatpush1.msra.mxu0 0.0
    %118 = vmatprep.subr.mxu0 0.0
    %119 = vmatpush1.msra.mxu0 0.0
    %120 = vmatprep.subr.mxu0 0.0
    %121 = vmatpush1.msra.mxu0 0.0
    %122 = vmatprep.subr.mxu0 0.0
    %123 = vmatpush1.msra.mxu0 0.0
    %124 = vmatprep.subr.mxu0 0.0
    %125 = vmatpush1.msra.mxu0 0.0
    %126 = vmatprep.subr.mxu0 0.0
    %127 = vmatpush1.msra.mxu0 0.0
    %128 = vmatprep.subr.mxu0 0.0
    %129 = vmatpush1.msra.mxu0 0.0
    %130 = vmatprep.subr.mxu0 0.0
    %131 = vmatpush1.msra.mxu0 0.0
    %132 = vmatprep.subr.mxu0 0.0
    %133 = vmatpush1.msra.mxu0 0.0
    %134 = vmatprep.subr.mxu0 0.0
    %135 = vmatpush1.msra.mxu0 0.0
    %136 = vmatprep.subr.mxu0 0.0
    %137 = vmatpush1.msra.mxu0 0.0
    %138 = vmatprep.subr.mxu0 0.0
    %139 = vmatpush1.msra.mxu0 0.0
    %140 = vmatprep.subr.mxu0 0.0
    %141 = vmatpush1.msra.mxu0 0.0
    %142 = vmatprep.subr.mxu0 0.0
    %143 = vmatpush1.msra.mxu0 0.0
    %144 = vmatprep.subr.mxu0 0.0
    %145 = vmatpush1.msra.mxu0 0.0
    %146 = vmatprep.subr.mxu0 0.0
    %147 = vmatpush1.msra.mxu0 0.0
    %148 = vmatprep.subr.mxu0 0.0
    %149 = vmatpush2.msra.mxu0 0.0
    %150 = vmatprep.subr.mxu0 0.0
    %151 = vmatpush2.msra.mxu0 0.0
    %152 = vmatprep.subr.mxu0 0.0
    %153 = vmatpush2.msra.mxu0 0.0
    %154 = vmatprep.subr.mxu0 0.0
    %155 = vmatpush2.msra.mxu0 0.0
    %156 = vmatprep.subr.mxu0 0.0
    %157 = vmatpush2.msra.mxu0 0.0
    %158 = vmatprep.subr.mxu0 0.0
    %159 = vmatpush2.msra.mxu0 0.0
    %160 = vmatprep.subr.mxu0 0.0
    %161 = vmatpush2.msra.mxu0 0.0
    %162 = vmatprep.subr.mxu0 0.0
    %163 = vmatpush2.msra.mxu0 0.0
    %164 = vmatprep.subr.mxu0 0.0
    %165 = vmatpush2.msra.mxu0 0.0
    %166 = vmatprep.subr.mxu0 0.0
    %167 = vmatpush2.msra.mxu0 0.0
    %168 = vmatprep.subr.mxu0 0.0
    %169 = vmatpush2.msra.mxu0 0.0
    %170 = vmatprep.subr.mxu0 0.0
    %171 = vmatpush2.msra.mxu0 0.0
    %172 = vmatprep.subr.mxu0 0.0
    %173 = vmatpush2.msra.mxu0 0.0
    %174 = vmatprep.subr.mxu0 0.0
    %175 = vmatpush2.msra.mxu0 0.0
    %176 = vmatprep.subr.mxu0 0.0
    %177 = vmatpush2.msra.mxu0 0.0
    %178 = vmatprep.subr.mxu0 0.0
    %179 = vmatpush2.msra.mxu0 0.0
    %180 = vmatprep.mubr.f32.mxu0 0.0
    %v181 = vand.u32 %v29, 4294901760
    %182 = vmatmul.mubr.f32.gmra.mxu0 %v181
    %v183 = vpop.f32.mrf.mxu0
    %v184 = vadd.f32 %v103, %v183
    %v185 = vpop.f32.mrf.mxu0
    %186 = vmatprep.mubr.f32.mxu0 0.0
    %v187 = vand.u32 %v30, 4294901760
    %188 = vmatmul.mubr.f32.gmra.mxu0 %v187
    %v189 = vpop.f32.mrf.mxu0
    %v190 = vadd.f32 %v113, %v189
    %v191 = vpop.f32.mrf.mxu0
    %192 = vdwg.mxu0
    %193 = vmatprep.subr.mxu0 0.0
    %194 = vmatpush1.msra.mxu0 0.0
    %195 = vmatprep.subr.mxu0 0.0
    %196 = vmatpush1.msra.mxu0 0.0
    %197 = vmatprep.subr.mxu0 0.0
    %198 = vmatpush1.msra.mxu0 0.0
    %199 = vmatprep.subr.mxu0 0.0
    %200 = vmatpush1.msra.mxu0 0.0
    %201 = vmatprep.subr.mxu0 0.0
    %202 = vmatpush1.msra.mxu0 0.0
    %203 = vmatprep.subr.mxu0 0.0
    %204 = vmatpush1.msra.mxu0 0.0
    %205 = vmatprep.subr.mxu0 0.0
    %206 = vmatpush1.msra.mxu0 0.0
    %207 = vmatprep.subr.mxu0 0.0
    %208 = vmatpush1.msra.mxu0 0.0
    %209 = vmatprep.subr.mxu0 0.0
    %210 = vmatpush1.msra.mxu0 0.0
    %211 = vmatprep.subr.mxu0 0.0
    %212 = vmatpush1.msra.mxu0 0.0
    %213 = vmatprep.subr.mxu0 0.0
    %214 = vmatpush1.msra.mxu0 0.0
    %215 = vmatprep.subr.mxu0 0.0
    %216 = vmatpush1.msra.mxu0 0.0
    %217 = vmatprep.subr.mxu0 0.0
    %218 = vmatpush1.msra.mxu0 0.0
    %219 = vmatprep.subr.mxu0 0.0
    %220 = vmatpush1.msra.mxu0 0.0
    %221 = vmatprep.subr.mxu0 0.0
    %222 = vmatpush1.msra.mxu0 0.0
    %223 = vmatprep.subr.mxu0 0.0
    %224 = vmatpush1.msra.mxu0 0.0
    %225 = vmatprep.subr.mxu0 0.0
    %226 = vmatpush2.msra.mxu0 0.0
    %227 = vmatprep.subr.mxu0 0.0
    %228 = vmatpush2.msra.mxu0 0.0
    %229 = vmatprep.subr.mxu0 0.0
    %230 = vmatpush2.msra.mxu0 0.0
    %231 = vmatprep.subr.mxu0 0.0
    %232 = vmatpush2.msra.mxu0 0.0
    %233 = vmatprep.subr.mxu0 0.0
    %234 = vmatpush2.msra.mxu0 0.0
    %235 = vmatprep.subr.mxu0 0.0
    %236 = vmatpush2.msra.mxu0 0.0
    %237 = vmatprep.subr.mxu0 0.0
    %238 = vmatpush2.msra.mxu0 0.0
    %239 = vmatprep.subr.mxu0 0.0
    %240 = vmatpush2.msra.mxu0 0.0
    %241 = vmatprep.subr.mxu0 0.0
    %242 = vmatpush2.msra.mxu0 0.0
    %243 = vmatprep.subr.mxu0 0.0
    %244 = vmatpush2.msra.mxu0 0.0
    %245 = vmatprep.subr.mxu0 0.0
    %246 = vmatpush2.msra.mxu0 0.0
    %247 = vmatprep.subr.mxu0 0.0
    %248 = vmatpush2.msra.mxu0 0.0
    %249 = vmatprep.subr.mxu0 0.0
    %250 = vmatpush2.msra.mxu0 0.0
    %251 = vmatprep.subr.mxu0 0.0
    %252 = vmatpush2.msra.mxu0 0.0
    %253 = vmatprep.subr.mxu0 0.0
    %254 = vmatpush2.msra.mxu0 0.0
    %255 = vmatprep.subr.mxu0 0.0
    %256 = vmatpush2.msra.mxu0 0.0
    %257 = vmatprep.mubr.f32.mxu0 0.0
    %v258 = vand.u32 %v29, 4294901760
    %v259 = vsub.f32 %v29, %v258
    %260 = vmatmul.mubr.f32.gmra.mxu0 %v259
    %v261 = vpop.f32.mrf.mxu0
    %v262 = vadd.f32 %v184, %v261
    %v263 = vpop.f32.mrf.mxu0
    %264 = vmatprep.mubr.f32.mxu0 0.0
    %v265 = vand.u32 %v30, 4294901760
    %v266 = vsub.f32 %v30, %v265
    %267 = vmatmul.mubr.f32.gmra.mxu0 %v266
    %v268 = vpop.f32.mrf.mxu0
    %v269 = vadd.f32 %v190, %v268
    %v270 = vpop.f32.mrf.mxu0
    %271 = vdwg.mxu0
    %272 = vmatprep.subr.mxu0 0.0
    %273 = vmatpush1.msra.mxu0 1.0
    %274 = vmatprep.subr.mxu0 0.0
    %275 = vmatpush1.msra.mxu0 1.0
    %276 = vmatprep.subr.mxu0 0.0
    %277 = vmatpush1.msra.mxu0 1.0
    %278 = vmatprep.subr.mxu0 0.0
    %279 = vmatpush1.msra.mxu0 1.0
    %280 = vmatprep.subr.mxu0 0.0
    %281 = vmatpush1.msra.mxu0 1.0
    %282 = vmatprep.subr.mxu0 0.0
    %283 = vmatpush1.msra.mxu0 1.0
    %284 = vmatprep.subr.mxu0 0.0
    %285 = vmatpush1.msra.mxu0 1.0
    %286 = vmatprep.subr.mxu0 0.0
    %287 = vmatpush1.msra.mxu0 1.0
    %288 = vmatprep.subr.mxu0 0.0
    %289 = vmatpush1.msra.mxu0 1.0
    %290 = vmatprep.subr.mxu0 0.0
    %291 = vmatpush1.msra.mxu0 1.0
    %292 = vmatprep.subr.mxu0 0.0
    %293 = vmatpush1.msra.mxu0 1.0
    %294 = vmatprep.subr.mxu0 0.0
    %295 = vmatpush1.msra.mxu0 1.0
    %296 = vmatprep.subr.mxu0 0.0
    %297 = vmatpush1.msra.mxu0 1.0
    %298 = vmatprep.subr.mxu0 0.0
    %299 = vmatpush1.msra.mxu0 1.0
    %300 = vmatprep.subr.mxu0 0.0
    %301 = vmatpush1.msra.mxu0 1.0
    %302 = vmatprep.subr.mxu0 0.0
    %303 = vmatpush1.msra.mxu0 1.0
    %304 = vmatprep.subr.mxu0 0.0
    %305 = vmatpush2.msra.mxu0 0.0
    %306 = vmatprep.subr.mxu0 0.0
    %307 = vmatpush2.msra.mxu0 0.0
    %308 = vmatprep.subr.mxu0 0.0
    %309 = vmatpush2.msra.mxu0 0.0
    %310 = vmatprep.subr.mxu0 0.0
    %311 = vmatpush2.msra.mxu0 0.0
    %312 = vmatprep.subr.mxu0 0.0
    %313 = vmatpush2.msra.mxu0 0.0
    %314 = vmatprep.subr.mxu0 0.0
    %315 = vmatpush2.msra.mxu0 0.0
    %316 = vmatprep.subr.mxu0 0.0
    %317 = vmatpush2.msra.mxu0 0.0
    %318 = vmatprep.subr.mxu0 0.0
    %319 = vmatpush2.msra.mxu0 0.0
    %320 = vmatprep.subr.mxu0 0.0
    %321 = vmatpush2.msra.mxu0 0.0
    %322 = vmatprep.subr.mxu0 0.0
    %323 = vmatpush2.msra.mxu0 0.0
    %324 = vmatprep.subr.mxu0 0.0
    %325 = vmatpush2.msra.mxu0 0.0
    %326 = vmatprep.subr.mxu0 0.0
    %327 = vmatpush2.msra.mxu0 0.0
    %328 = vmatprep.subr.mxu0 0.0
    %329 = vmatpush2.msra.mxu0 0.0
    %330 = vmatprep.subr.mxu0 0.0
    %331 = vmatpush2.msra.mxu0 0.0
    %332 = vmatprep.subr.mxu0 0.0
    %333 = vmatpush2.msra.mxu0 0.0
    %334 = vmatprep.subr.mxu0 0.0
    %335 = vmatpush2.msra.mxu0 0.0
    %336 = vmatprep.mubr.f32.mxu0 0.0
    %v337 = vand.u32 %v29, 4294901760
    %v338 = vsub.f32 %v29, %v337
    %v339 = vand.u32 %v338, 4294901760
    %340 = vmatmul.mubr.f32.gmra.mxu0 %v339
    %v341 = vpop.f32.mrf.mxu0
    %v342 = vadd.f32 %v262, %v341
    %v343 = vpop.f32.mrf.mxu0
    %344 = vmatprep.mubr.f32.mxu0 0.0
    %v345 = vand.u32 %v30, 4294901760
    %v346 = vsub.f32 %v30, %v345
    %v347 = vand.u32 %v346, 4294901760
    %348 = vmatmul.mubr.f32.gmra.mxu0 %v347
    %v349 = vpop.f32.mrf.mxu0
    %v350 = vadd.f32 %v269, %v349
    %v351 = vpop.f32.mrf.mxu0
    %352 = vdwg.mxu0
    %353 = vmatprep.subr.mxu0 0.0
    %354 = vmatpush1.msra.mxu0 0.0
    %355 = vmatprep.subr.mxu0 0.0
    %356 = vmatpush1.msra.mxu0 0.0
    %357 = vmatprep.subr.mxu0 0.0
    %358 = vmatpush1.msra.mxu0 0.0
    %359 = vmatprep.subr.mxu0 0.0
    %360 = vmatpush1.msra.mxu0 0.0
    %361 = vmatprep.subr.mxu0 0.0
    %362 = vmatpush1.msra.mxu0 0.0
    %363 = vmatprep.subr.mxu0 0.0
    %364 = vmatpush1.msra.mxu0 0.0
    %365 = vmatprep.subr.mxu0 0.0
    %366 = vmatpush1.msra.mxu0 0.0
    %367 = vmatprep.subr.mxu0 0.0
    %368 = vmatpush1.msra.mxu0 0.0
    %369 = vmatprep.subr.mxu0 0.0
    %370 = vmatpush1.msra.mxu0 0.0
    %371 = vmatprep.subr.mxu0 0.0
    %372 = vmatpush1.msra.mxu0 0.0
    %373 = vmatprep.subr.mxu0 0.0
    %374 = vmatpush1.msra.mxu0 0.0
    %375 = vmatprep.subr.mxu0 0.0
    %376 = vmatpush1.msra.mxu0 0.0
    %377 = vmatprep.subr.mxu0 0.0
    %378 = vmatpush1.msra.mxu0 0.0
    %379 = vmatprep.subr.mxu0 0.0
    %380 = vmatpush1.msra.mxu0 0.0
    %381 = vmatprep.subr.mxu0 0.0
    %382 = vmatpush1.msra.mxu0 0.0
    %383 = vmatprep.subr.mxu0 0.0
    %384 = vmatpush1.msra.mxu0 0.0
    %385 = vmatprep.subr.mxu0 0.0
    %386 = vmatpush2.msra.mxu0 0.0
    %387 = vmatprep.subr.mxu0 0.0
    %388 = vmatpush2.msra.mxu0 0.0
    %389 = vmatprep.subr.mxu0 0.0
    %390 = vmatpush2.msra.mxu0 0.0
    %391 = vmatprep.subr.mxu0 0.0
    %392 = vmatpush2.msra.mxu0 0.0
    %393 = vmatprep.subr.mxu0 0.0
    %394 = vmatpush2.msra.mxu0 0.0
    %395 = vmatprep.subr.mxu0 0.0
    %396 = vmatpush2.msra.mxu0 0.0
    %397 = vmatprep.subr.mxu0 0.0
    %398 = vmatpush2.msra.mxu0 0.0
    %399 = vmatprep.subr.mxu0 0.0
    %400 = vmatpush2.msra.mxu0 0.0
    %401 = vmatprep.subr.mxu0 0.0
    %402 = vmatpush2.msra.mxu0 0.0
    %403 = vmatprep.subr.mxu0 0.0
    %404 = vmatpush2.msra.mxu0 0.0
    %405 = vmatprep.subr.mxu0 0.0
    %406 = vmatpush2.msra.mxu0 0.0
    %407 = vmatprep.subr.mxu0 0.0
    %408 = vmatpush2.msra.mxu0 0.0
    %409 = vmatprep.subr.mxu0 0.0
    %410 = vmatpush2.msra.mxu0 0.0
    %411 = vmatprep.subr.mxu0 0.0
    %412 = vmatpush2.msra.mxu0 0.0
    %413 = vmatprep.subr.mxu0 0.0
    %414 = vmatpush2.msra.mxu0 0.0
    %415 = vmatprep.subr.mxu0 0.0
    %416 = vmatpush2.msra.mxu0 0.0
    %417 = vmatprep.mubr.f32.mxu0 0.0
    %v418 = vand.u32 %v29, 4294901760
    %419 = vmatmul.mubr.f32.gmra.mxu0 %v418
    %v420 = vpop.f32.mrf.mxu0
    %v421 = vadd.f32 %v342, %v420
    %v422 = vpop.f32.mrf.mxu0
    %423 = vmatprep.mubr.f32.mxu0 0.0
    %v424 = vand.u32 %v30, 4294901760
    %425 = vmatmul.mubr.f32.gmra.mxu0 %v424
    %v426 = vpop.f32.mrf.mxu0
    %v427 = vadd.f32 %v350, %v426
    %v428 = vpop.f32.mrf.mxu0
    %429 = vdwg.mxu0
    %430 = vmatprep.subr.mxu0 0.0
    %431 = vmatpush1.msra.mxu0 1.0
    %432 = vmatprep.subr.mxu0 0.0
    %433 = vmatpush1.msra.mxu0 1.0
    %434 = vmatprep.subr.mxu0 0.0
    %435 = vmatpush1.msra.mxu0 1.0
    %436 = vmatprep.subr.mxu0 0.0
    %437 = vmatpush1.msra.mxu0 1.0
    %438 = vmatprep.subr.mxu0 0.0
    %439 = vmatpush1.msra.mxu0 1.0
    %440 = vmatprep.subr.mxu0 0.0
    %441 = vmatpush1.msra.mxu0 1.0
    %442 = vmatprep.subr.mxu0 0.0
    %443 = vmatpush1.msra.mxu0 1.0
    %444 = vmatprep.subr.mxu0 0.0
    %445 = vmatpush1.msra.mxu0 1.0
    %446 = vmatprep.subr.mxu0 0.0
    %447 = vmatpush1.msra.mxu0 1.0
    %448 = vmatprep.subr.mxu0 0.0
    %449 = vmatpush1.msra.mxu0 1.0
    %450 = vmatprep.subr.mxu0 0.0
    %451 = vmatpush1.msra.mxu0 1.0
    %452 = vmatprep.subr.mxu0 0.0
    %453 = vmatpush1.msra.mxu0 1.0
    %454 = vmatprep.subr.mxu0 0.0
    %455 = vmatpush1.msra.mxu0 1.0
    %456 = vmatprep.subr.mxu0 0.0
    %457 = vmatpush1.msra.mxu0 1.0
    %458 = vmatprep.subr.mxu0 0.0
    %459 = vmatpush1.msra.mxu0 1.0
    %460 = vmatprep.subr.mxu0 0.0
    %461 = vmatpush1.msra.mxu0 1.0
    %462 = vmatprep.subr.mxu0 0.0
    %463 = vmatpush2.msra.mxu0 0.0
    %464 = vmatprep.subr.mxu0 0.0
    %465 = vmatpush2.msra.mxu0 0.0
    %466 = vmatprep.subr.mxu0 0.0
    %467 = vmatpush2.msra.mxu0 0.0
    %468 = vmatprep.subr.mxu0 0.0
    %469 = vmatpush2.msra.mxu0 0.0
    %470 = vmatprep.subr.mxu0 0.0
    %471 = vmatpush2.msra.mxu0 0.0
    %472 = vmatprep.subr.mxu0 0.0
    %473 = vmatpush2.msra.mxu0 0.0
    %474 = vmatprep.subr.mxu0 0.0
    %475 = vmatpush2.msra.mxu0 0.0
    %476 = vmatprep.subr.mxu0 0.0
    %477 = vmatpush2.msra.mxu0 0.0
    %478 = vmatprep.subr.mxu0 0.0
    %479 = vmatpush2.msra.mxu0 0.0
    %480 = vmatprep.subr.mxu0 0.0
    %481 = vmatpush2.msra.mxu0 0.0
    %482 = vmatprep.subr.mxu0 0.0
    %483 = vmatpush2.msra.mxu0 0.0
    %484 = vmatprep.subr.mxu0 0.0
    %485 = vmatpush2.msra.mxu0 0.0
    %486 = vmatprep.subr.mxu0 0.0
    %487 = vmatpush2.msra.mxu0 0.0
    %488 = vmatprep.subr.mxu0 0.0
    %489 = vmatpush2.msra.mxu0 0.0
    %490 = vmatprep.subr.mxu0 0.0
    %491 = vmatpush2.msra.mxu0 0.0
    %492 = vmatprep.subr.mxu0 0.0
    %493 = vmatpush2.msra.mxu0 0.0
    %494 = vmatprep.mubr.f32.mxu0 0.0
    %v495 = vand.u32 %v29, 4294901760
    %496 = vmatmul.mubr.f32.gmra.mxu0 %v495
    %v497 = vpop.f32.mrf.mxu0
    %v498 = vadd.f32 %v421, %v497
    %v499 = vpop.f32.mrf.mxu0
    %500 = vmatprep.mubr.f32.mxu0 0.0
    %v501 = vand.u32 %v30, 4294901760
    %502 = vmatmul.mubr.f32.gmra.mxu0 %v501
    %v503 = vpop.f32.mrf.mxu0
    %v504 = vadd.f32 %v427, %v503
    %v505 = vpop.f32.mrf.mxu0
    %506 = vdwg.mxu0
    %v507 = vmul.f32 %v498, 0.0078125
    %v508 = vmul.f32 %v504, 0.0078125
    %510 = vset.pattern.permute.xlu0 0
    %511 = vperm.xlu0 %510, %v507
    %v512 = vpop.permute.xlu0 %511
    %515 = vset.pattern.permute.xlu0 0
    %516 = vperm.xlu0 %515, %v508
    %v517 = vpop.permute.xlu0 %516
    %v519 = vsub.f32 %v29, %v512
    %v520 = vsub.f32 %v30, %v517
    %v521 = vmul.f32 %v519, %v519
    %v522 = vmul.f32 %v520, %v520
    %523 = vmatprep.subr.mxu0 0.0
    %524 = vmatpush1.msra.mxu0 1.0
    %525 = vmatprep.subr.mxu0 0.0
    %526 = vmatpush1.msra.mxu0 1.0
    %527 = vmatprep.subr.mxu0 0.0
    %528 = vmatpush1.msra.mxu0 1.0
    %529 = vmatprep.subr.mxu0 0.0
    %530 = vmatpush1.msra.mxu0 1.0
    %531 = vmatprep.subr.mxu0 0.0
    %532 = vmatpush1.msra.mxu0 1.0
    %533 = vmatprep.subr.mxu0 0.0
    %534 = vmatpush1.msra.mxu0 1.0
    %535 = vmatprep.subr.mxu0 0.0
    %536 = vmatpush1.msra.mxu0 1.0
    %537 = vmatprep.subr.mxu0 0.0
    %538 = vmatpush1.msra.mxu0 1.0
    %539 = vmatprep.subr.mxu0 0.0
    %540 = vmatpush1.msra.mxu0 1.0
    %541 = vmatprep.subr.mxu0 0.0
    %542 = vmatpush1.msra.mxu0 1.0
    %543 = vmatprep.subr.mxu0 0.0
    %544 = vmatpush1.msra.mxu0 1.0
    %545 = vmatprep.subr.mxu0 0.0
    %546 = vmatpush1.msra.mxu0 1.0
    %547 = vmatprep.subr.mxu0 0.0
    %548 = vmatpush1.msra.mxu0 1.0
    %549 = vmatprep.subr.mxu0 0.0
    %550 = vmatpush1.msra.mxu0 1.0
    %551 = vmatprep.subr.mxu0 0.0
    %552 = vmatpush1.msra.mxu0 1.0
    %553 = vmatprep.subr.mxu0 0.0
    %554 = vmatpush1.msra.mxu0 1.0
    %555 = vmatprep.subr.mxu0 0.0
    %556 = vmatpush2.msra.mxu0 0.0
    %557 = vmatprep.subr.mxu0 0.0
    %558 = vmatpush2.msra.mxu0 0.0
    %559 = vmatprep.subr.mxu0 0.0
    %560 = vmatpush2.msra.mxu0 0.0
    %561 = vmatprep.subr.mxu0 0.0
    %562 = vmatpush2.msra.mxu0 0.0
    %563 = vmatprep.subr.mxu0 0.0
    %564 = vmatpush2.msra.mxu0 0.0
    %565 = vmatprep.subr.mxu0 0.0
    %566 = vmatpush2.msra.mxu0 0.0
    %567 = vmatprep.subr.mxu0 0.0
    %568 = vmatpush2.msra.mxu0 0.0
    %569 = vmatprep.subr.mxu0 0.0
    %570 = vmatpush2.msra.mxu0 0.0
    %571 = vmatprep.subr.mxu0 0.0
    %572 = vmatpush2.msra.mxu0 0.0
    %573 = vmatprep.subr.mxu0 0.0
    %574 = vmatpush2.msra.mxu0 0.0
    %575 = vmatprep.subr.mxu0 0.0
    %576 = vmatpush2.msra.mxu0 0.0
    %577 = vmatprep.subr.mxu0 0.0
    %578 = vmatpush2.msra.mxu0 0.0
    %579 = vmatprep.subr.mxu0 0.0
    %580 = vmatpush2.msra.mxu0 0.0
    %581 = vmatprep.subr.mxu0 0.0
    %582 = vmatpush2.msra.mxu0 0.0
    %583 = vmatprep.subr.mxu0 0.0
    %584 = vmatpush2.msra.mxu0 0.0
    %585 = vmatprep.subr.mxu0 0.0
    %586 = vmatpush2.msra.mxu0 0.0
    %587 = vmatprep.mubr.f32.mxu0 0.0
    %v588 = vand.u32 %v521, 4294901760
    %v589 = vsub.f32 %v521, %v588
    %v590 = vand.u32 %v589, 4294901760
    %v591 = vsub.f32 %v589, %v590
    %v592 = vand.u32 %v591, 4294901760
    %593 = vmatmul.mubr.f32.gmra.mxu0 %v592
    %v594 = vpop.f32.mrf.mxu0
    %v595 = vadd.f32 0.0, %v594
    %v596 = vpop.f32.mrf.mxu0
    %597 = vmatprep.mubr.f32.mxu0 0.0
    %v598 = vand.u32 %v522, 4294901760
    %v599 = vsub.f32 %v522, %v598
    %v600 = vand.u32 %v599, 4294901760
    %v601 = vsub.f32 %v599, %v600
    %v602 = vand.u32 %v601, 4294901760
    %603 = vmatmul.mubr.f32.gmra.mxu0 %v602
    %v604 = vpop.f32.mrf.mxu0
    %v605 = vadd.f32 0.0, %v604
    %v606 = vpop.f32.mrf.mxu0
    %607 = vdwg.mxu0
    %608 = vmatprep.subr.mxu0 0.0
    %609 = vmatpush1.msra.mxu0 0.0
    %610 = vmatprep.subr.mxu0 0.0
    %611 = vmatpush1.msra.mxu0 0.0
    %612 = vmatprep.subr.mxu0 0.0
    %613 = vmatpush1.msra.mxu0 0.0
    %614 = vmatprep.subr.mxu0 0.0
    %615 = vmatpush1.msra.mxu0 0.0
    %616 = vmatprep.subr.mxu0 0.0
    %617 = vmatpush1.msra.mxu0 0.0
    %618 = vmatprep.subr.mxu0 0.0
    %619 = vmatpush1.msra.mxu0 0.0
    %620 = vmatprep.subr.mxu0 0.0
    %621 = vmatpush1.msra.mxu0 0.0
    %622 = vmatprep.subr.mxu0 0.0
    %623 = vmatpush1.msra.mxu0 0.0
    %624 = vmatprep.subr.mxu0 0.0
    %625 = vmatpush1.msra.mxu0 0.0
    %626 = vmatprep.subr.mxu0 0.0
    %627 = vmatpush1.msra.mxu0 0.0
    %628 = vmatprep.subr.mxu0 0.0
    %629 = vmatpush1.msra.mxu0 0.0
    %630 = vmatprep.subr.mxu0 0.0
    %631 = vmatpush1.msra.mxu0 0.0
    %632 = vmatprep.subr.mxu0 0.0
    %633 = vmatpush1.msra.mxu0 0.0
    %634 = vmatprep.subr.mxu0 0.0
    %635 = vmatpush1.msra.mxu0 0.0
    %636 = vmatprep.subr.mxu0 0.0
    %637 = vmatpush1.msra.mxu0 0.0
    %638 = vmatprep.subr.mxu0 0.0
    %639 = vmatpush1.msra.mxu0 0.0
    %640 = vmatprep.subr.mxu0 0.0
    %641 = vmatpush2.msra.mxu0 0.0
    %642 = vmatprep.subr.mxu0 0.0
    %643 = vmatpush2.msra.mxu0 0.0
    %644 = vmatprep.subr.mxu0 0.0
    %645 = vmatpush2.msra.mxu0 0.0
    %646 = vmatprep.subr.mxu0 0.0
    %647 = vmatpush2.msra.mxu0 0.0
    %648 = vmatprep.subr.mxu0 0.0
    %649 = vmatpush2.msra.mxu0 0.0
    %650 = vmatprep.subr.mxu0 0.0
    %651 = vmatpush2.msra.mxu0 0.0
    %652 = vmatprep.subr.mxu0 0.0
    %653 = vmatpush2.msra.mxu0 0.0
    %654 = vmatprep.subr.mxu0 0.0
    %655 = vmatpush2.msra.mxu0 0.0
    %656 = vmatprep.subr.mxu0 0.0
    %657 = vmatpush2.msra.mxu0 0.0
    %658 = vmatprep.subr.mxu0 0.0
    %659 = vmatpush2.msra.mxu0 0.0
    %660 = vmatprep.subr.mxu0 0.0
    %661 = vmatpush2.msra.mxu0 0.0
    %662 = vmatprep.subr.mxu0 0.0
    %663 = vmatpush2.msra.mxu0 0.0
    %664 = vmatprep.subr.mxu0 0.0
    %665 = vmatpush2.msra.mxu0 0.0
    %666 = vmatprep.subr.mxu0 0.0
    %667 = vmatpush2.msra.mxu0 0.0
    %668 = vmatprep.subr.mxu0 0.0
    %669 = vmatpush2.msra.mxu0 0.0
    %670 = vmatprep.subr.mxu0 0.0
    %671 = vmatpush2.msra.mxu0 0.0
    %672 = vmatprep.mubr.f32.mxu0 0.0
    %v673 = vand.u32 %v521, 4294901760
    %674 = vmatmul.mubr.f32.gmra.mxu0 %v673
    %v675 = vpop.f32.mrf.mxu0
    %v676 = vadd.f32 %v595, %v675
    %v677 = vpop.f32.mrf.mxu0
    %678 = vmatprep.mubr.f32.mxu0 0.0
    %v679 = vand.u32 %v522, 4294901760
    %680 = vmatmul.mubr.f32.gmra.mxu0 %v679
    %v681 = vpop.f32.mrf.mxu0
    %v682 = vadd.f32 %v605, %v681
    %v683 = vpop.f32.mrf.mxu0
    %684 = vdwg.mxu0
    %685 = vmatprep.subr.mxu0 0.0
    %686 = vmatpush1.msra.mxu0 0.0
    %687 = vmatprep.subr.mxu0 0.0
    %688 = vmatpush1.msra.mxu0 0.0
    %689 = vmatprep.subr.mxu0 0.0
    %690 = vmatpush1.msra.mxu0 0.0
    %691 = vmatprep.subr.mxu0 0.0
    %692 = vmatpush1.msra.mxu0 0.0
    %693 = vmatprep.subr.mxu0 0.0
    %694 = vmatpush1.msra.mxu0 0.0
    %695 = vmatprep.subr.mxu0 0.0
    %696 = vmatpush1.msra.mxu0 0.0
    %697 = vmatprep.subr.mxu0 0.0
    %698 = vmatpush1.msra.mxu0 0.0
    %699 = vmatprep.subr.mxu0 0.0
    %700 = vmatpush1.msra.mxu0 0.0
    %701 = vmatprep.subr.mxu0 0.0
    %702 = vmatpush1.msra.mxu0 0.0
    %703 = vmatprep.subr.mxu0 0.0
    %704 = vmatpush1.msra.mxu0 0.0
    %705 = vmatprep.subr.mxu0 0.0
    %706 = vmatpush1.msra.mxu0 0.0
    %707 = vmatprep.subr.mxu0 0.0
    %708 = vmatpush1.msra.mxu0 0.0
    %709 = vmatprep.subr.mxu0 0.0
    %710 = vmatpush1.msra.mxu0 0.0
    %711 = vmatprep.subr.mxu0 0.0
    %712 = vmatpush1.msra.mxu0 0.0
    %713 = vmatprep.subr.mxu0 0.0
    %714 = vmatpush1.msra.mxu0 0.0
    %715 = vmatprep.subr.mxu0 0.0
    %716 = vmatpush1.msra.mxu0 0.0
    %717 = vmatprep.subr.mxu0 0.0
    %718 = vmatpush2.msra.mxu0 0.0
    %719 = vmatprep.subr.mxu0 0.0
    %720 = vmatpush2.msra.mxu0 0.0
    %721 = vmatprep.subr.mxu0 0.0
    %722 = vmatpush2.msra.mxu0 0.0
    %723 = vmatprep.subr.mxu0 0.0
    %724 = vmatpush2.msra.mxu0 0.0
    %725 = vmatprep.subr.mxu0 0.0
    %726 = vmatpush2.msra.mxu0 0.0
    %727 = vmatprep.subr.mxu0 0.0
    %728 = vmatpush2.msra.mxu0 0.0
    %729 = vmatprep.subr.mxu0 0.0
    %730 = vmatpush2.msra.mxu0 0.0
    %731 = vmatprep.subr.mxu0 0.0
    %732 = vmatpush2.msra.mxu0 0.0
    %733 = vmatprep.subr.mxu0 0.0
    %734 = vmatpush2.msra.mxu0 0.0
    %735 = vmatprep.subr.mxu0 0.0
    %736 = vmatpush2.msra.mxu0 0.0
    %737 = vmatprep.subr.mxu0 0.0
    %738 = vmatpush2.msra.mxu0 0.0
    %739 = vmatprep.subr.mxu0 0.0
    %740 = vmatpush2.msra.mxu0 0.0
    %741 = vmatprep.subr.mxu0 0.0
    %742 = vmatpush2.msra.mxu0 0.0
    %743 = vmatprep.subr.mxu0 0.0
    %744 = vmatpush2.msra.mxu0 0.0
    %745 = vmatprep.subr.mxu0 0.0
    %746 = vmatpush2.msra.mxu0 0.0
    %747 = vmatprep.subr.mxu0 0.0
    %748 = vmatpush2.msra.mxu0 0.0
    %749 = vmatprep.mubr.f32.mxu0 0.0
    %v750 = vand.u32 %v521, 4294901760
    %v751 = vsub.f32 %v521, %v750
    %752 = vmatmul.mubr.f32.gmra.mxu0 %v751
    %v753 = vpop.f32.mrf.mxu0
    %v754 = vadd.f32 %v676, %v753
    %v755 = vpop.f32.mrf.mxu0
    %756 = vmatprep.mubr.f32.mxu0 0.0
    %v757 = vand.u32 %v522, 4294901760
    %v758 = vsub.f32 %v522, %v757
    %759 = vmatmul.mubr.f32.gmra.mxu0 %v758
    %v760 = vpop.f32.mrf.mxu0
    %v761 = vadd.f32 %v682, %v760
    %v762 = vpop.f32.mrf.mxu0
    %763 = vdwg.mxu0
    %764 = vmatprep.subr.mxu0 0.0
    %765 = vmatpush1.msra.mxu0 1.0
    %766 = vmatprep.subr.mxu0 0.0
    %767 = vmatpush1.msra.mxu0 1.0
    %768 = vmatprep.subr.mxu0 0.0
    %769 = vmatpush1.msra.mxu0 1.0
    %770 = vmatprep.subr.mxu0 0.0
    %771 = vmatpush1.msra.mxu0 1.0
    %772 = vmatprep.subr.mxu0 0.0
    %773 = vmatpush1.msra.mxu0 1.0
    %774 = vmatprep.subr.mxu0 0.0
    %775 = vmatpush1.msra.mxu0 1.0
    %776 = vmatprep.subr.mxu0 0.0
    %777 = vmatpush1.msra.mxu0 1.0
    %778 = vmatprep.subr.mxu0 0.0
    %779 = vmatpush1.msra.mxu0 1.0
    %780 = vmatprep.subr.mxu0 0.0
    %781 = vmatpush1.msra.mxu0 1.0
    %782 = vmatprep.subr.mxu0 0.0
    %783 = vmatpush1.msra.mxu0 1.0
    %784 = vmatprep.subr.mxu0 0.0
    %785 = vmatpush1.msra.mxu0 1.0
    %786 = vmatprep.subr.mxu0 0.0
    %787 = vmatpush1.msra.mxu0 1.0
    %788 = vmatprep.subr.mxu0 0.0
    %789 = vmatpush1.msra.mxu0 1.0
    %790 = vmatprep.subr.mxu0 0.0
    %791 = vmatpush1.msra.mxu0 1.0
    %792 = vmatprep.subr.mxu0 0.0
    %793 = vmatpush1.msra.mxu0 1.0
    %794 = vmatprep.subr.mxu0 0.0
    %795 = vmatpush1.msra.mxu0 1.0
    %796 = vmatprep.subr.mxu0 0.0
    %797 = vmatpush2.msra.mxu0 0.0
    %798 = vmatprep.subr.mxu0 0.0
    %799 = vmatpush2.msra.mxu0 0.0
    %800 = vmatprep.subr.mxu0 0.0
    %801 = vmatpush2.msra.mxu0 0.0
    %802 = vmatprep.subr.mxu0 0.0
    %803 = vmatpush2.msra.mxu0 0.0
    %804 = vmatprep.subr.mxu0 0.0
    %805 = vmatpush2.msra.mxu0 0.0
    %806 = vmatprep.subr.mxu0 0.0
    %807 = vmatpush2.msra.mxu0 0.0
    %808 = vmatprep.subr.mxu0 0.0
    %809 = vmatpush2.msra.mxu0 0.0
    %810 = vmatprep.subr.mxu0 0.0
    %811 = vmatpush2.msra.mxu0 0.0
    %812 = vmatprep.subr.mxu0 0.0
    %813 = vmatpush2.msra.mxu0 0.0
    %814 = vmatprep.subr.mxu0 0.0
    %815 = vmatpush2.msra.mxu0 0.0
    %816 = vmatprep.subr.mxu0 0.0
    %817 = vmatpush2.msra.mxu0 0.0
    %818 = vmatprep.subr.mxu0 0.0
    %819 = vmatpush2.msra.mxu0 0.0
    %820 = vmatprep.subr.mxu0 0.0
    %821 = vmatpush2.msra.mxu0 0.0
    %822 = vmatprep.subr.mxu0 0.0
    %823 = vmatpush2.msra.mxu0 0.0
    %824 = vmatprep.subr.mxu0 0.0
    %825 = vmatpush2.msra.mxu0 0.0
    %826 = vmatprep.subr.mxu0 0.0
    %827 = vmatpush2.msra.mxu0 0.0
    %828 = vmatprep.mubr.f32.mxu0 0.0
    %v829 = vand.u32 %v521, 4294901760
    %v830 = vsub.f32 %v521, %v829
    %v831 = vand.u32 %v830, 4294901760
    %832 = vmatmul.mubr.f32.gmra.mxu0 %v831
    %v833 = vpop.f32.mrf.mxu0
    %v834 = vadd.f32 %v754, %v833
    %v835 = vpop.f32.mrf.mxu0
    %836 = vmatprep.mubr.f32.mxu0 0.0
    %v837 = vand.u32 %v522, 4294901760
    %v838 = vsub.f32 %v522, %v837
    %v839 = vand.u32 %v838, 4294901760
    %840 = vmatmul.mubr.f32.gmra.mxu0 %v839
    %v841 = vpop.f32.mrf.mxu0
    %v842 = vadd.f32 %v761, %v841
    %v843 = vpop.f32.mrf.mxu0
    %844 = vdwg.mxu0
    %845 = vmatprep.subr.mxu0 0.0
    %846 = vmatpush1.msra.mxu0 0.0
    %847 = vmatprep.subr.mxu0 0.0
    %848 = vmatpush1.msra.mxu0 0.0
    %849 = vmatprep.subr.mxu0 0.0
    %850 = vmatpush1.msra.mxu0 0.0
    %851 = vmatprep.subr.mxu0 0.0
    %852 = vmatpush1.msra.mxu0 0.0
    %853 = vmatprep.subr.mxu0 0.0
    %854 = vmatpush1.msra.mxu0 0.0
    %855 = vmatprep.subr.mxu0 0.0
    %856 = vmatpush1.msra.mxu0 0.0
    %857 = vmatprep.subr.mxu0 0.0
    %858 = vmatpush1.msra.mxu0 0.0
    %859 = vmatprep.subr.mxu0 0.0
    %860 = vmatpush1.msra.mxu0 0.0
    %861 = vmatprep.subr.mxu0 0.0
    %862 = vmatpush1.msra.mxu0 0.0
    %863 = vmatprep.subr.mxu0 0.0
    %864 = vmatpush1.msra.mxu0 0.0
    %865 = vmatprep.subr.mxu0 0.0
    %866 = vmatpush1.msra.mxu0 0.0
    %867 = vmatprep.subr.mxu0 0.0
    %868 = vmatpush1.msra.mxu0 0.0
    %869 = vmatprep.subr.mxu0 0.0
    %870 = vmatpush1.msra.mxu0 0.0
    %871 = vmatprep.subr.mxu0 0.0
    %872 = vmatpush1.msra.mxu0 0.0
    %873 = vmatprep.subr.mxu0 0.0
    %874 = vmatpush1.msra.mxu0 0.0
    %875 = vmatprep.subr.mxu0 0.0
    %876 = vmatpush1.msra.mxu0 0.0
    %877 = vmatprep.subr.mxu0 0.0
    %878 = vmatpush2.msra.mxu0 0.0
    %879 = vmatprep.subr.mxu0 0.0
    %880 = vmatpush2.msra.mxu0 0.0
    %881 = vmatprep.subr.mxu0 0.0
    %882 = vmatpush2.msra.mxu0 0.0
    %883 = vmatprep.subr.mxu0 0.0
    %884 = vmatpush2.msra.mxu0 0.0
    %885 = vmatprep.subr.mxu0 0.0
    %886 = vmatpush2.msra.mxu0 0.0
    %887 = vmatprep.subr.mxu0 0.0
    %888 = vmatpush2.msra.mxu0 0.0
    %889 = vmatprep.subr.mxu0 0.0
    %890 = vmatpush2.msra.mxu0 0.0
    %891 = vmatprep.subr.mxu0 0.0
    %892 = vmatpush2.msra.mxu0 0.0
    %893 = vmatprep.subr.mxu0 0.0
    %894 = vmatpush2.msra.mxu0 0.0
    %895 = vmatprep.subr.mxu0 0.0
    %896 = vmatpush2.msra.mxu0 0.0
    %897 = vmatprep.subr.mxu0 0.0
    %898 = vmatpush2.msra.mxu0 0.0
    %899 = vmatprep.subr.mxu0 0.0
    %900 = vmatpush2.msra.mxu0 0.0
    %901 = vmatprep.subr.mxu0 0.0
    %902 = vmatpush2.msra.mxu0 0.0
    %903 = vmatprep.subr.mxu0 0.0
    %904 = vmatpush2.msra.mxu0 0.0
    %905 = vmatprep.subr.mxu0 0.0
    %906 = vmatpush2.msra.mxu0 0.0
    %907 = vmatprep.subr.mxu0 0.0
    %908 = vmatpush2.msra.mxu0 0.0
    %909 = vmatprep.mubr.f32.mxu0 0.0
    %v910 = vand.u32 %v521, 4294901760
    %911 = vmatmul.mubr.f32.gmra.mxu0 %v910
    %v912 = vpop.f32.mrf.mxu0
    %v913 = vadd.f32 %v834, %v912
    %v914 = vpop.f32.mrf.mxu0
    %915 = vmatprep.mubr.f32.mxu0 0.0
    %v916 = vand.u32 %v522, 4294901760
    %917 = vmatmul.mubr.f32.gmra.mxu0 %v916
    %v918 = vpop.f32.mrf.mxu0
    %v919 = vadd.f32 %v842, %v918
    %v920 = vpop.f32.mrf.mxu0
    %921 = vdwg.mxu0
    %922 = vmatprep.subr.mxu0 0.0
    %923 = vmatpush1.msra.mxu0 1.0
    %924 = vmatprep.subr.mxu0 0.0
    %925 = vmatpush1.msra.mxu0 1.0
    %926 = vmatprep.subr.mxu0 0.0
    %927 = vmatpush1.msra.mxu0 1.0
    %928 = vmatprep.subr.mxu0 0.0
    %929 = vmatpush1.msra.mxu0 1.0
    %930 = vmatprep.subr.mxu0 0.0
    %931 = vmatpush1.msra.mxu0 1.0
    %932 = vmatprep.subr.mxu0 0.0
    %933 = vmatpush1.msra.mxu0 1.0
    %934 = vmatprep.subr.mxu0 0.0
    %935 = vmatpush1.msra.mxu0 1.0
    %936 = vmatprep.subr.mxu0 0.0
    %937 = vmatpush1.msra.mxu0 1.0
    %938 = vmatprep.subr.mxu0 0.0
    %939 = vmatpush1.msra.mxu0 1.0
    %940 = vmatprep.subr.mxu0 0.0
    %941 = vmatpush1.msra.mxu0 1.0
    %942 = vmatprep.subr.mxu0 0.0
    %943 = vmatpush1.msra.mxu0 1.0
    %944 = vmatprep.subr.mxu0 0.0
    %945 = vmatpush1.msra.mxu0 1.0
    %946 = vmatprep.subr.mxu0 0.0
    %947 = vmatpush1.msra.mxu0 1.0
    %948 = vmatprep.subr.mxu0 0.0
    %949 = vmatpush1.msra.mxu0 1.0
    %950 = vmatprep.subr.mxu0 0.0
    %951 = vmatpush1.msra.mxu0 1.0
    %952 = vmatprep.subr.mxu0 0.0
    %953 = vmatpush1.msra.mxu0 1.0
    %954 = vmatprep.subr.mxu0 0.0
    %955 = vmatpush2.msra.mxu0 0.0
    %956 = vmatprep.subr.mxu0 0.0
    %957 = vmatpush2.msra.mxu0 0.0
    %958 = vmatprep.subr.mxu0 0.0
    %959 = vmatpush2.msra.mxu0 0.0
    %960 = vmatprep.subr.mxu0 0.0
    %961 = vmatpush2.msra.mxu0 0.0
    %962 = vmatprep.subr.mxu0 0.0
    %963 = vmatpush2.msra.mxu0 0.0
    %964 = vmatprep.subr.mxu0 0.0
    %965 = vmatpush2.msra.mxu0 0.0
    %966 = vmatprep.subr.mxu0 0.0
    %967 = vmatpush2.msra.mxu0 0.0
    %968 = vmatprep.subr.mxu0 0.0
    %969 = vmatpush2.msra.mxu0 0.0
    %970 = vmatprep.subr.mxu0 0.0
    %971 = vmatpush2.msra.mxu0 0.0
    %972 = vmatprep.subr.mxu0 0.0
    %973 = vmatpush2.msra.mxu0 0.0
    %974 = vmatprep.subr.mxu0 0.0
    %975 = vmatpush2.msra.mxu0 0.0
    %976 = vmatprep.subr.mxu0 0.0
    %977 = vmatpush2.msra.mxu0 0.0
    %978 = vmatprep.subr.mxu0 0.0
    %979 = vmatpush2.msra.mxu0 0.0
    %980 = vmatprep.subr.mxu0 0.0
    %981 = vmatpush2.msra.mxu0 0.0
    %982 = vmatprep.subr.mxu0 0.0
    %983 = vmatpush2.msra.mxu0 0.0
    %984 = vmatprep.subr.mxu0 0.0
    %985 = vmatpush2.msra.mxu0 0.0
    %986 = vmatprep.mubr.f32.mxu0 0.0
    %v987 = vand.u32 %v521, 4294901760
    %988 = vmatmul.mubr.f32.gmra.mxu0 %v987
    %v989 = vpop.f32.mrf.mxu0
    %v990 = vadd.f32 %v913, %v989
    %v991 = vpop.f32.mrf.mxu0
    %992 = vmatprep.mubr.f32.mxu0 0.0
    %v993 = vand.u32 %v522, 4294901760
    %994 = vmatmul.mubr.f32.gmra.mxu0 %v993
    %v995 = vpop.f32.mrf.mxu0
    %v996 = vadd.f32 %v919, %v995
    %v997 = vpop.f32.mrf.mxu0
    %998 = vdwg.mxu0
    %v999 = vmul.f32 %v990, 0.007874016
    %v1000 = vmul.f32 %v996, 0.007874016
    %v1001 = vadd.f32 %v999, 1e-05
    %v1002 = vadd.f32 %v1000, 1e-05
    %v1003 = vrsqrt.pop %v1001
    %v1004 = vrsqrt.pop %v1002
    %1006 = vset.pattern.permute.xlu0 0
    %1007 = vperm.xlu0 %1006, %v1003
    %v1008 = vpop.permute.xlu0 %1007
    %1011 = vset.pattern.permute.xlu0 0
    %1012 = vperm.xlu0 %1011, %v1004
    %v1013 = vpop.permute.xlu0 %1012
    %v1015 = vmul.f32 %v519, %v1008
    %v1016 = vmul.f32 %v520, %v1013
    %v1017 = vld [vmem:[%s1] sm:$0x1]
    %v1018 = vld [vmem:[%s2] sm:$0x1]
    %v1020 = vlaneseq
    %v1021 = vshrl.u32 %v1020, 7
    %v1022 = vsub.s32 0, %v1021
    %v1023 = vrot.slane %v1017, %v1022
    %v1025 = vmul.f32 %v1023, %v1015
    %v1026 = vmul.f32 %v1023, %v1016
    %v1028 = vlaneseq
    %v1029 = vshrl.u32 %v1028, 7
    %v1030 = vsub.s32 0, %v1029
    %v1031 = vrot.slane %v1018, %v1030
    %v1033 = vadd.f32 %v1025, %v1031
    %v1034 = vadd.f32 %v1026, %v1031
    %1035 = vst [vmem:[#allocation5] sm:$0xff] %v1033
    %1036 = vst [vmem:[#allocation5 + $0x8] sm:$0xff] %v1034
    // Predicated region
    $region18: #{tpu_custom_call.1} parent=1 // pred_check
      _
    $region19: #{tpu_custom_call.1} parent=1 // pred_check_branch
      %1038 = sbr.rel (0) target = $region21
    $region20: #{tpu_custom_call.1} parent=1 // pred_region
      %s1040 = ssub.s32 256, 256
      %1041 = vsyncadd [#allocation4], %s1040
      %s1042 = sshll.u32 [#allocation5], 4
      %s1043 = int_to_ptr.vmem [resolvable:$true] %s1042
      %1048 = dma.vmem_to_hbm [thread:$0]  %s1043, 256, %s3, [#allocation4], 128, 128, 8
    $region21: #{tpu_custom_call.1} parent=1 // pred_fallthru
      _
    // Predicated region
    $region22: #{tpu_custom_call.1} parent=1 // pred_check
      _
    $region23: #{tpu_custom_call.1} parent=1 // pred_check_branch
      %1050 = sbr.rel (0) target = $region25
    $region24: #{tpu_custom_call.1} parent=1 // pred_region
      %1051 = dma.done [#allocation4], 256
    $region25: #{tpu_custom_call.1} parent=1 // pred_fallthru
      _
    %1052 = vsyncpa [#allocation3], 1
    %1053 = vsyncpa [#allocation4], 1

// kernel: tpu_custom_call.1
$region0: #{tpu_custom_call.1}
  #allocation0 [shape = 'u32[]', space=smem, size = 0x4, offset = 0x4, fixed_abs, tag = 'smem constant byte address 0x4 - core index']
  #allocation1 [shape = 'u32[144,128]{1,0:T(1,128)}', space=vmem, size = 0x12000, scoped, tag = 'internal scratch']
  %s0 = inlined_call_operand.hbm [shape: f32[16,128], index: 0, kind: input, shape index: {}]
  %s1 = inlined_call_operand.vmem [shape: f32[1,128], index: 1, kind: input, shape index: {}]
  %s2 = inlined_call_operand.vmem [shape: f32[1,128], index: 2, kind: input, shape index: {}]
  %s3 = inlined_call_operand.hbm [shape: f32[16,128], index: 3, kind: output, shape index: {}]
  %s4 = sld [smem:[#allocation0]]
  $region26: #{tpu_custom_call.1} parent=0
    _
  %s6 = ssub.s32 1, %s4
  %s7 = scalar_select 0, %s6, %s4
  $region1: #{tpu_custom_call.1} parent=0
    #allocation2 [shape = 'u8[8192]{0}', space=vmem, size = 0x2000, scoped, tag = 'input window, operand 0, single buffered']
    #allocation3 [shape = 's32[1]{0}', space=sflag, size = 0x4, scoped, tag = 'scoped memory for tpu_custom_call.1']
    #allocation4 [shape = 's32[1]{0}', space=sflag, size = 0x4, scoped, tag = 'scoped memory for tpu_custom_call.1']
    #allocation5 [shape = 'u8[8192]{0}', space=vmem, size = 0x2000, scoped, tag = 'output window, operand 0, single buffered']
    %8 = vsyncpa [#allocation3], 0
    %9 = vsyncpa [#allocation4], 0
    // Predicated region
    $region2: #{tpu_custom_call.1} parent=1 // pred_check
      _
    $region3: #{tpu_custom_call.1} parent=1 // pred_check_branch
      %11 = sbr.rel (0) target = $region5
    $region4: #{tpu_custom_call.1} parent=1 // pred_region
      %s13 = ssub.s32 256, 256
      %14 = vsyncadd [#allocation3], %s13
      %s15 = sshll.u32 [#allocation2], 4
      %s16 = int_to_ptr.vmem [resolvable:$true] %s15
      %21 = dma.hbm_to_vmem [thread:$0]  %s0, 256, %s16, [#allocation3], 128, 128, 8
    $region5: #{tpu_custom_call.1} parent=1 // pred_fallthru
      _
    // Predicated region
    $region6: #{tpu_custom_call.1} parent=1 // pred_check
      _
    $region7: #{tpu_custom_call.1} parent=1 // pred_check_branch
      %23 = sbr.rel (0) target = $region9
    $region8: #{tpu_custom_call.1} parent=1 // pred_region
      _
    $region9: #{tpu_custom_call.1} parent=1 // pred_fallthru
      _
    // Predicated region
    $region10: #{tpu_custom_call.1} parent=1 // pred_check
      _
    $region11: #{tpu_custom_call.1} parent=1 // pred_check_branch
      %25 = sbr.rel (0) target = $region13
    $region12: #{tpu_custom_call.1} parent=1 // pred_region
      _
    $region13: #{tpu_custom_call.1} parent=1 // pred_fallthru
      _
    // Predicated region
    $region14: #{tpu_custom_call.1} parent=1 // pred_check
      _
    $region15: #{tpu_custom_call.1} parent=1 // pred_check_branch
      %27 = sbr.rel (0) target = $region17
    $region16: #{tpu_custom_call.1} parent=1 // pred_region
      %28 = dma.done [#allocation3], 256
    $region17: #{tpu_custom_call.1} parent=1 // pred_fallthru
      _
    %v29 = vld [vmem:[#allocation2] sm:$0xff]
    %v30 = vld [vmem:[#allocation2 + $0x8] sm:$0xff]
    %31 = vadd.xlane.f32.xlu0 %v29
    %v32 = vpop.xlane.xlu0 %31
    %33 = vadd.xlane.f32.xlu0 %v30
    %v34 = vpop.xlane.xlu0 %33
    %v35 = vmul.f32 %v32, 0.0078125
    %v36 = vmul.f32 %v34, 0.0078125
    %v37 = vsub.f32 %v29, %v35
    %v38 = vsub.f32 %v30, %v36
    %v39 = vmul.f32 %v37, %v37
    %v40 = vmul.f32 %v38, %v38
    %41 = vadd.xlane.f32.xlu0 %v39
    %v42 = vpop.xlane.xlu0 %41
    %43 = vadd.xlane.f32.xlu0 %v40
    %v44 = vpop.xlane.xlu0 %43
    %v45 = vmul.f32 %v42, 0.007874016
    %v46 = vmul.f32 %v44, 0.007874016
    %v47 = vadd.f32 %v45, 1e-05
    %v48 = vadd.f32 %v46, 1e-05
    %v49 = vrsqrt.pop %v47
    %v50 = vrsqrt.pop %v48
    %v51 = vmul.f32 %v37, %v49
    %v52 = vmul.f32 %v38, %v50
    %v53 = vld [vmem:[%s1] sm:$0x1]
    %v54 = vld [vmem:[%s2] sm:$0x1]
    %v56 = vlaneseq
    %v57 = vshrl.u32 %v56, 7
    %v58 = vsub.s32 0, %v57
    %v59 = vrot.slane %v53, %v58
    %v61 = vmul.f32 %v59, %v51
    %v62 = vmul.f32 %v59, %v52
    %v64 = vlaneseq
    %v65 = vshrl.u32 %v64, 7
    %v66 = vsub.s32 0, %v65
    %v67 = vrot.slane %v54, %v66
    %v69 = vadd.f32 %v61, %v67
    %v70 = vadd.f32 %v62, %v67
    %71 = vst [vmem:[#allocation5] sm:$0xff] %v69
    %72 = vst [vmem:[#allocation5 + $0x8] sm:$0xff] %v70
    // Predicated region
    $region18: #{tpu_custom_call.1} parent=1 // pred_check
      _
    $region19: #{tpu_custom_call.1} parent=1 // pred_check_branch
      %74 = sbr.rel (0) target = $region21
    $region20: #{tpu_custom_call.1} parent=1 // pred_region
      %s76 = ssub.s32 256, 256
      %77 = vsyncadd [#allocation4], %s76
      %s78 = sshll.u32 [#allocation5], 4
      %s79 = int_to_ptr.vmem [resolvable:$true] %s78
      %84 = dma.vmem_to_hbm [thread:$0]  %s79, 256, %s3, [#allocation4], 128, 128, 8
    $region21: #{tpu_custom_call.1} parent=1 // pred_fallthru
      _
    // Predicated region
    $region22: #{tpu_custom_call.1} parent=1 // pred_check
      _
    $region23: #{tpu_custom_call.1} parent=1 // pred_check_branch
      %86 = sbr.rel (0) target = $region25
    $region24: #{tpu_custom_call.1} parent=1 // pred_region
      %87 = dma.done [#allocation4], 256
    $region25: #{tpu_custom_call.1} parent=1 // pred_fallthru
      _
    %88 = vsyncpa [#allocation3], 1
    %89 = vsyncpa [#allocation4], 1

</llo_original>
